<compile_context>
chip_gen: v7x
topology: tpu7x:2x2x1
jax: 0.10.0
libtpu: 0.0.40
codegen_flags: <defaults>
</compile_context>

<pallas_src>
import functools

import jax
import jax.numpy as jnp
from jax.experimental import pallas as pl
from jax.experimental.pallas import tpu as pltpu

_MiB = 1024 * 1024


def _round_up(a, m):
    return (a + m - 1) // m * m


def _vmem_capacity_bytes():
    """Physical VMEM per core; conservative fallback if the query is unavailable."""
    cap = None
    try:
        cap = getattr(pltpu.get_tpu_info(), "vmem_capacity_bytes", None)
    except Exception:  # non-TPU trace host / interpret mode
        cap = None
    if not cap or cap <= 0:
        cap = 64 * _MiB  # v7x physical VMEM (smallest current generation) as a safe floor
    return int(cap)


def _linear_kernel(x_ref, w_ref, b_ref, o_ref, *, compute_dtype, precision):
    # x_ref: (tm, K)   w_ref: (K, tn)   b_ref: (1, tn) f32   o_ref: (tm, tn)
    x = x_ref[...]
    w = w_ref[...]
    if compute_dtype is not None:
        # In-kernel cast (VPU) right before the MXU dot: cheaper than a wrapper-side
        # cast pass over HBM for a memory-bound matmul.
        x = x.astype(compute_dtype)
        w = w.astype(compute_dtype)
    acc = jnp.dot(x, w, preferred_element_type=jnp.float32, precision=precision)
    acc = acc + b_ref[...]                 # f32 bias broadcast over rows
    o_ref[...] = acc.astype(o_ref.dtype)
    # Dropout(p=0) is identity -> no masking emitted.


def ctc_head_forward(x, w_t, b, *, compute_dtype=None, out_dtype=None,
                     tm=None, tn=None, precision=None):
    """CTC_Head.forward: fc(x) = x @ W.T + b, then Dropout(p=0) == identity.

    x:   (B, T, K)   activations (native dtype, no wrapper cast/pad)
    w_t: (K, N)      transposed PyTorch weight (weight.T)
    b:   (N,)        bias
    compute_dtype=None  -> matmul in native dtype (PyTorch semantics);
    compute_dtype=bf16  -> explicit opt-in lower-precision MXU matmul.
    """
    B, T, K = x.shape
    Kw, N = w_t.shape
    assert K == Kw and b.shape == (N,)
    M = B * T
    out_dtype = x.dtype if out_dtype is None else out_dtype

    x_bytes = jnp.dtype(x.dtype).itemsize
    w_bytes = jnp.dtype(w_t.dtype).itemsize
    o_bytes = jnp.dtype(out_dtype).itemsize

    # ---- generation-aware VMEM budget; the scoped limit is set explicitly below ----
    vmem_cap = _vmem_capacity_bytes()       # 128 MiB (v5e/v6e) or 64 MiB (v7x)
    budget = vmem_cap // 2                  # headroom for internal scratch / pipelining

    # ---- choose tn (vocab tile): keep the whole W resident whenever it fits ----
    w_resident_bytes = 2 * K * N * w_bytes  # default double-buffered pipeline copies
    if tn is None:
        tn = N if w_resident_bytes <= (2 * budget) // 3 else 512
    if tn != N:
        assert tn % 128 == 0 and tn >= 128, "tn must be lane-dense (multiple of 128)"

    # ---- choose tm (row tile): largest 16/128-aligned tile <= 1024 within budget ----
    align = 128 if M >= 128 else 16         # 16 = bf16 sublane packing; 128 = MXU rows

    def blocks_bytes(tm_):
        return (2 * tm_ * K * x_bytes       # x tile (double-buffered)
                + 2 * K * tn * w_bytes      # weight tile (double-buffered)
                + 2 * tn * 4                # f32 bias tile
                + 2 * tm_ * tn * o_bytes)   # out tile (double-buffered)

    if tm is None:
        tm = min(1024, _round_up(M, align))
        while tm > align and blocks_bytes(tm) > budget:
            tm = max(align, _round_up(tm // 2, align))
    assert tm % 8 == 0, "tm must be sublane-aligned (multiple of 8)"

    grid_m = pl.cdiv(M, tm)
    grid_n = pl.cdiv(N, tn)

    x2d = x.reshape(M, K)                      # free reshape; NO cast, NO pad
    b2d = b.reshape(1, N).astype(jnp.float32)  # tiny; bias added in f32

    kernel = functools.partial(_linear_kernel, compute_dtype=compute_dtype,
                               precision=precision)

    cost = pl.CostEstimate(
        flops=2 * M * N * K,
        bytes_accessed=M * K * x_bytes + K * N * w_bytes + N * 4 + M * N * o_bytes,
        transcendentals=0,
    )

    if grid_n == 1:
        # Weight-resident path: constant W/bias block index -> DMA'd once, stays in VMEM.
        grid = (grid_m,)
        in_specs = [
            pl.BlockSpec((tm, K), lambda i: (i, 0)),
            pl.BlockSpec((K, N), lambda i: (0, 0)),
            pl.BlockSpec((1, N), lambda i: (0, 0)),
        ]
        out_specs = pl.BlockSpec((tm, N), lambda i: (i, 0))
    else:
        # Tiled-vocab path: pick grid-axis order so the larger operand is the resident
        # one; the inner-axis operand is the one that gets re-streamed from HBM.
        x_stream = M * K * x_bytes
        w_stream = K * N * w_bytes
        if grid_m * w_stream + x_stream <= grid_n * x_stream + w_stream:
            # m outer / n inner: W re-streamed grid_m times (x is the big operand).
            grid = (grid_m, grid_n)
            in_specs = [
                pl.BlockSpec((tm, K), lambda i, j: (i, 0)),
                pl.BlockSpec((K, tn), lambda i, j: (0, j)),
                pl.BlockSpec((1, tn), lambda i, j: (0, j)),
            ]
            out_specs = pl.BlockSpec((tm, tn), lambda i, j: (i, j))
        else:
            # n outer / m inner: x re-streamed grid_n times (W is the big operand).
            grid = (grid_n, grid_m)
            in_specs = [
                pl.BlockSpec((tm, K), lambda j, i: (i, 0)),
                pl.BlockSpec((K, tn), lambda j, i: (0, j)),
                pl.BlockSpec((1, tn), lambda j, i: (0, j)),
            ]
            out_specs = pl.BlockSpec((tm, tn), lambda j, i: (i, j))

    dims = ("parallel",) * len(grid)        # no reduction axis; megacore-shardable

    vmem_limit = int(min(vmem_cap, max(blocks_bytes(tm) + 8 * _MiB, 32 * _MiB)))

    out2d = pl.pallas_call(
        kernel,
        out_shape=jax.ShapeDtypeStruct((M, N), out_dtype),
        grid_spec=pltpu.PrefetchScalarGridSpec(
            num_scalar_prefetch=0,
            grid=grid,
            in_specs=in_specs,
            out_specs=out_specs,
        ),
        compiler_params=pltpu.CompilerParams(
            dimension_semantics=dims,
            vmem_limit_bytes=vmem_limit,
        ),
        cost_estimate=cost,
    )(x2d, w_t, b2d)

    return out2d.reshape(B, T, N)


if __name__ == "__main__":
    # Small shapes consistent with a CTC recognition head.
    B, T = 2, 8            # batch, sequence length
    input_size = 32        # feature dim coming into the head
    output_size = 128      # vocabulary size (lane-friendly)

    key = jax.random.PRNGKey(0)
    kx, kw, kb = jax.random.split(key, 3)

    x = jax.random.normal(kx, (B, T, input_size), dtype=jnp.float32)

    # Deterministic parameters (PyTorch Linear shapes: weight (out, in), bias (out,)).
    w = jax.random.normal(kw, (output_size, input_size), dtype=jnp.float32) * 0.05
    b = jax.random.normal(kb, (output_size,), dtype=jnp.float32) * 0.05
    w_t = w.T  # (input_size, output_size) layout used by the kernel

    # Default path: native f32 compute (matches the PyTorch f32 Linear; Dropout(p=0) == id).
    out = jax.block_until_ready(ctc_head_forward(x, w_t, b))
    assert out.shape == (B, T, output_size)
    assert out.dtype == x.dtype

    ref = jnp.einsum("btk,nk->btn", x, w) + b
    assert jnp.allclose(out, ref, atol=2e-2, rtol=2e-2), float(jnp.max(jnp.abs(out - ref)))

    # Opt-in bf16 compute path (in-kernel cast; looser numerics by construction).
    out_bf16 = jax.block_until_ready(
        ctc_head_forward(x, w_t, b, compute_dtype=jnp.bfloat16))
    assert out_bf16.shape == (B, T, output_size)
    assert jnp.allclose(out_bf16, ref, atol=5e-2, rtol=5e-2)

    print("KERNEL_OK")
</pallas_src>

<mosaic_0001>
module attributes {stable_mosaic.version = 11 : i64} {
  func.func @_linear_kernel(%arg0: i32, %arg1: memref<16x32xf32, #tpu.memory_space<vmem>>, %arg2: memref<32x128xf32, #tpu.memory_space<vmem>>, %arg3: memref<1x128xf32, #tpu.memory_space<vmem>>, %arg4: memref<16x128xf32, #tpu.memory_space<vmem>>) attributes {dimension_semantics = [#tpu.dimension_semantics<parallel>], iteration_bounds = array<i64: 1>, scalar_prefetch = 0 : i64, scratch_operands = 0 : i64, tpu.core_type = #tpu.core_type<tc>, window_params = [{transform_indices = @transform_0, window_bounds = array<i64: 16, 32>}, {pipeline_mode = #tpu.pipeline_mode<synchronous>, transform_indices = @transform_1, window_bounds = array<i64: 32, 128>}, {pipeline_mode = #tpu.pipeline_mode<synchronous>, transform_indices = @transform_2, window_bounds = array<i64: 1, 128>}, {transform_indices = @transform_3, window_bounds = array<i64: 16, 128>}]} {
    %c0 = arith.constant 0 : index
    %c0_0 = arith.constant 0 : index
    %0 = vector.load %arg1[%c0, %c0_0] : memref<16x32xf32, #tpu.memory_space<vmem>>, vector<16x32xf32>
    %c0_1 = arith.constant 0 : index
    %c0_2 = arith.constant 0 : index
    %1 = vector.load %arg2[%c0_1, %c0_2] : memref<32x128xf32, #tpu.memory_space<vmem>>, vector<32x128xf32>
    %cst = arith.constant dense<0.000000e+00> : vector<16x128xf32>
    %2 = tpu.matmul %0, %1, %cst {dimension_numbers = #tpu.dot_dimension_numbers<[1], [0], [0], [1], [0, 0, 1, 1], [], []>} : vector<16x32xf32>, vector<32x128xf32>, vector<16x128xf32> -> vector<16x128xf32>
    %c0_3 = arith.constant 0 : index
    %c0_4 = arith.constant 0 : index
    %3 = vector.load %arg3[%c0_3, %c0_4] : memref<1x128xf32, #tpu.memory_space<vmem>>, vector<1x128xf32>
    %4 = vector.broadcast %3 : vector<1x128xf32> to vector<16x128xf32>
    %5 = arith.addf %2, %4 : vector<16x128xf32>
    %c0_5 = arith.constant 0 : index
    %c0_6 = arith.constant 0 : index
    %6 = vector.load %arg4[%c0_5, %c0_6] : memref<16x128xf32, #tpu.memory_space<vmem>>, vector<16x128xf32>
    tpu.vector_store %arg4[%c0_5, %c0_6], %5 {strides = array<i32>} : memref<16x128xf32, #tpu.memory_space<vmem>>, vector<16x128xf32>,
    return
  }
  func.func @transform_0(%arg0: i32) -> (i32, i32) {
    %c0_i32 = arith.constant 0 : i32
    %c0_i32_0 = arith.constant 0 : i32
    return %arg0, %c0_i32 : i32, i32
  }
  func.func @transform_1(%arg0: i32) -> (i32, i32) {
    %c0_i32 = arith.constant 0 : i32
    %c0_i32_0 = arith.constant 0 : i32
    %c0_i32_1 = arith.constant 0 : i32
    return %c0_i32, %c0_i32_0 : i32, i32
  }
  func.func @transform_2(%arg0: i32) -> (i32, i32) {
    %c0_i32 = arith.constant 0 : i32
    %c0_i32_0 = arith.constant 0 : i32
    %c0_i32_1 = arith.constant 0 : i32
    return %c0_i32, %c0_i32_0 : i32, i32
  }
  func.func @transform_3(%arg0: i32) -> (i32, i32) {
    %c0_i32 = arith.constant 0 : i32
    %c0_i32_0 = arith.constant 0 : i32
    return %arg0, %c0_i32 : i32, i32
  }
}

</mosaic_0001>

<llo_original>
// kernel: tpu_custom_call.1
$region0: #{tpu_custom_call.1}
  #allocation0 [shape = 'u32[]', space=smem, size = 0x4, offset = 0x4, fixed_abs, tag = 'smem constant byte address 0x4 - core index']
  #allocation1 [shape = 'u32[144,128]{1,0:T(1,128)}', space=vmem, size = 0x12000, scoped, tag = 'internal scratch']
  %s0 = inlined_call_operand.hbm [shape: f32[16,32], index: 0, kind: input, shape index: {}]
  %s1 = inlined_call_operand.hbm [shape: f32[32,128], index: 1, kind: input, shape index: {}]
  %s2 = inlined_call_operand.vmem [shape: f32[1,128], index: 2, kind: input, shape index: {}]
  %s3 = inlined_call_operand.hbm [shape: f32[16,128], index: 3, kind: output, shape index: {}]
  %s4 = sld [smem:[#allocation0]]
  $region30: #{tpu_custom_call.1} parent=0
    _
  %s6 = ssub.s32 1, %s4
  %s7 = scalar_select 0, %s6, %s4
  $region1: #{tpu_custom_call.1} parent=0
    #allocation2 [shape = 'u8[8192]{0}', space=vmem, size = 0x2000, scoped, tag = 'input window, operand 0, single buffered']
    #allocation3 [shape = 's32[1]{0}', space=sflag, size = 0x4, scoped, tag = 'scoped memory for tpu_custom_call.1']
    #allocation4 [shape = 's32[1]{0}', space=sflag, size = 0x4, scoped, tag = 'scoped memory for tpu_custom_call.1']
    #allocation5 [shape = 'u8[16384]{0}', space=vmem, size = 0x4000, scoped, tag = 'input window, operand 1, single buffered']
    #allocation6 [shape = 's32[1]{0}', space=sflag, size = 0x4, scoped, tag = 'scoped memory for tpu_custom_call.1']
    #allocation7 [shape = 'u8[8192]{0}', space=vmem, size = 0x2000, scoped, tag = 'output window, operand 0, single buffered']
    %8 = vsyncpa [#allocation3], 0
    %9 = vsyncpa [#allocation6], 0
    %10 = vsyncpa [#allocation4], 0
    // Predicated region
    $region2: #{tpu_custom_call.1} parent=1 // pred_check
      _
    $region3: #{tpu_custom_call.1} parent=1 // pred_check_branch
      %12 = sbr.rel (0) target = $region5
    $region4: #{tpu_custom_call.1} parent=1 // pred_region
      %s14 = ssub.s32 256, 256
      %15 = vsyncadd [#allocation3], %s14
      %s16 = sshll.u32 [#allocation2], 4
      %s17 = int_to_ptr.vmem [resolvable:$true] %s16
      %22 = dma.hbm_to_vmem [thread:$0]  %s0, 256, %s17, [#allocation3], 128, 128, 8
    $region5: #{tpu_custom_call.1} parent=1 // pred_fallthru
      _
    // Predicated region
    $region6: #{tpu_custom_call.1} parent=1 // pred_check
      _
    $region7: #{tpu_custom_call.1} parent=1 // pred_check_branch
      %24 = sbr.rel (0) target = $region9
    $region8: #{tpu_custom_call.1} parent=1 // pred_region
      %s26 = ssub.s32 512, 512
      %27 = vsyncadd [#allocation6], %s26
      %s28 = sshll.u32 [#allocation5], 4
      %s29 = int_to_ptr.vmem [resolvable:$true] %s28
      %34 = dma.hbm_to_vmem [thread:$0]  %s1, 512, %s29, [#allocation6], 128, 128, 8
    $region9: #{tpu_custom_call.1} parent=1 // pred_fallthru
      _
    // Predicated region
    $region10: #{tpu_custom_call.1} parent=1 // pred_check
      _
    $region11: #{tpu_custom_call.1} parent=1 // pred_check_branch
      %36 = sbr.rel (0) target = $region13
    $region12: #{tpu_custom_call.1} parent=1 // pred_region
      _
    $region13: #{tpu_custom_call.1} parent=1 // pred_fallthru
      _
    // Predicated region
    $region14: #{tpu_custom_call.1} parent=1 // pred_check
      _
    $region15: #{tpu_custom_call.1} parent=1 // pred_check_branch
      %38 = sbr.rel (0) target = $region17
    $region16: #{tpu_custom_call.1} parent=1 // pred_region
      %39 = dma.done [#allocation3], 256
    $region17: #{tpu_custom_call.1} parent=1 // pred_fallthru
      _
    // Predicated region
    $region18: #{tpu_custom_call.1} parent=1 // pred_check
      _
    $region19: #{tpu_custom_call.1} parent=1 // pred_check_branch
      %41 = sbr.rel (0) target = $region21
    $region20: #{tpu_custom_call.1} parent=1 // pred_region
      %42 = dma.done [#allocation6], 512
    $region21: #{tpu_custom_call.1} parent=1 // pred_fallthru
      _
    %v43 = vld [vmem:[#allocation2] sm:$0xff]
    %v44 = vld [vmem:[#allocation2 + $0x8] sm:$0xff]
    %v45 = vld [vmem:[#allocation5] sm:$0xff]
    %v46 = vld [vmem:[#allocation5 + $0x8] sm:$0xff]
    %v47 = vld [vmem:[#allocation5 + $0x10] sm:$0xff]
    %v48 = vld [vmem:[#allocation5 + $0x18] sm:$0xff]
    %v49 = vld [vmem:[%s2] sm:$0x1]
    %v51 = vlaneseq
    %v52 = vshrl.u32 %v51, 7
    %v53 = vsub.s32 0, %v52
    %v54 = vrot.slane %v49, %v53
    %vm56 = vcmask 261120
    %v58 = vsel %vm56, %v43, 0
    %v61 = vsel %vm56, %v44, 0
    %63 = vmatprep.subr.mxu0 0.0
    %64 = vmatpush1.msra.mxu0 %v45
    %65 = vmatprep.subr.mxu0 0.0
    %66 = vmatpush1.msra.mxu0 %v46
    %67 = vmatprep.subr.mxu0 0.0
    %68 = vmatpush1.msra.mxu0 %v47
    %69 = vmatprep.subr.mxu0 0.0
    %70 = vmatpush1.msra.mxu0 %v48
    %71 = vmatprep.subr.mxu0 0.0
    %72 = vmatpush1.msra.mxu0 0.0
    %73 = vmatprep.subr.mxu0 0.0
    %74 = vmatpush1.msra.mxu0 0.0
    %75 = vmatprep.subr.mxu0 0.0
    %76 = vmatpush1.msra.mxu0 0.0
    %77 = vmatprep.subr.mxu0 0.0
    %78 = vmatpush1.msra.mxu0 0.0
    %79 = vmatprep.subr.mxu0 0.0
    %80 = vmatpush1.msra.mxu0 0.0
    %81 = vmatprep.subr.mxu0 0.0
    %82 = vmatpush1.msra.mxu0 0.0
    %83 = vmatprep.subr.mxu0 0.0
    %84 = vmatpush1.msra.mxu0 0.0
    %85 = vmatprep.subr.mxu0 0.0
    %86 = vmatpush1.msra.mxu0 0.0
    %87 = vmatprep.subr.mxu0 0.0
    %88 = vmatpush1.msra.mxu0 0.0
    %89 = vmatprep.subr.mxu0 0.0
    %90 = vmatpush1.msra.mxu0 0.0
    %91 = vmatprep.subr.mxu0 0.0
    %92 = vmatpush1.msra.mxu0 0.0
    %93 = vmatprep.subr.mxu0 0.0
    %94 = vmatpush1.msra.mxu0 0.0
    %95 = vmatprep.subr.mxu0 0.0
    %96 = vmatpush1.msra.mxu0 0.0
    %97 = vmatprep.subr.mxu0 0.0
    %98 = vmatpush1.msra.mxu0 0.0
    %99 = vmatprep.subr.mxu0 0.0
    %100 = vmatpush1.msra.mxu0 0.0
    %101 = vmatprep.subr.mxu0 0.0
    %102 = vmatpush1.msra.mxu0 0.0
    %103 = vmatprep.subr.mxu0 0.0
    %104 = vmatpush1.msra.mxu0 0.0
    %105 = vmatprep.subr.mxu0 0.0
    %106 = vmatpush1.msra.mxu0 0.0
    %107 = vmatprep.subr.mxu0 0.0
    %108 = vmatpush1.msra.mxu0 0.0
    %109 = vmatprep.subr.mxu0 0.0
    %110 = vmatpush1.msra.mxu0 0.0
    %111 = vmatprep.subr.mxu0 0.0
    %112 = vmatpush1.msra.mxu0 0.0
    %113 = vmatprep.subr.mxu0 0.0
    %114 = vmatpush1.msra.mxu0 0.0
    %115 = vmatprep.subr.mxu0 0.0
    %116 = vmatpush1.msra.mxu0 0.0
    %117 = vmatprep.subr.mxu0 0.0
    %118 = vmatpush1.msra.mxu0 0.0
    %119 = vmatprep.subr.mxu0 0.0
    %120 = vmatpush1.msra.mxu0 0.0
    %121 = vmatprep.subr.mxu0 0.0
    %122 = vmatpush1.msra.mxu0 0.0
    %123 = vmatprep.subr.mxu0 0.0
    %124 = vmatpush1.msra.mxu0 0.0
    %125 = vmatprep.subr.mxu0 0.0
    %126 = vmatpush1.msra.mxu0 0.0
    %127 = vmatprep.mubr.f32.mxu0 0.0
    %128 = vmatmul.mubr.f32.gmra.mrb[0].mxu0 %v58
    %v129 = vpop.f32.mrb[0].mxu0
    %v130 = vadd.f32 %v54, %v129
    %v131 = vpop.f32.mrb[0].mxu0
    %132 = vmatprep.mubr.f32.mxu0 0.0
    %133 = vmatmul.mubr.f32.gmra.mrb[0].mxu0 %v61
    %v134 = vpop.f32.mrb[0].mxu0
    %v135 = vadd.f32 %v54, %v134
    %v136 = vpop.f32.mrb[0].mxu0
    %137 = vdwg.mxu0
    %138 = vst [vmem:[#allocation7] sm:$0xff] %v130
    %139 = vst [vmem:[#allocation7 + $0x8] sm:$0xff] %v135
    // Predicated region
    $region22: #{tpu_custom_call.1} parent=1 // pred_check
      _
    $region23: #{tpu_custom_call.1} parent=1 // pred_check_branch
      %141 = sbr.rel (0) target = $region25
    $region24: #{tpu_custom_call.1} parent=1 // pred_region
      %s143 = ssub.s32 256, 256
      %144 = vsyncadd [#allocation4], %s143
      %s145 = sshll.u32 [#allocation7], 4
      %s146 = int_to_ptr.vmem [resolvable:$true] %s145
      %151 = dma.vmem_to_hbm [thread:$0]  %s146, 256, %s3, [#allocation4], 128, 128, 8
    $region25: #{tpu_custom_call.1} parent=1 // pred_fallthru
      _
    // Predicated region
    $region26: #{tpu_custom_call.1} parent=1 // pred_check
      _
    $region27: #{tpu_custom_call.1} parent=1 // pred_check_branch
      %153 = sbr.rel (0) target = $region29
    $region28: #{tpu_custom_call.1} parent=1 // pred_region
      %154 = dma.done [#allocation4], 256
    $region29: #{tpu_custom_call.1} parent=1 // pred_fallthru
      _
    %155 = vsyncpa [#allocation3], 1
    %156 = vsyncpa [#allocation6], 1
    %157 = vsyncpa [#allocation4], 1

</llo_original>
